<compile_context>
chip_gen: v6e
topology: v6e:2x2x1
jax: 0.10.0
libtpu: 0.0.40
codegen_flags: <defaults>
</compile_context>

<pallas_src>
import jax
import jax.numpy as jnp
from jax.experimental import pallas as pl
from jax.experimental.pallas import tpu as pltpu

HIDDEN = 16      # GCNConv(nfeat, 16) -> GCNConv(16, nclass)
LANE = 128       # TPU lane width; hidden/class dims are padded up to this
NEG_BIG = -1e30  # mask value for padded class lanes (finite, exp() -> 0)


def _round_up(a, b):
    return -(-a // b) * b


def _pad_dim(n):
    # Adjacency is padded to a multiple of 128 so that any multiple-of-128
    # column tile divides it and the int8 (32,128) layout is respected.
    return _round_up(n, LANE)


def _tiles(np_, tile_m, tile_k):
    """Pick (row_tile, col_tile) dividing np_ (np_ is a multiple of 128)."""
    tm = 32                                    # int8 sublane packing unit
    cand = min((tile_m // 32) * 32, np_)
    while cand >= 32:
        if np_ % cand == 0:
            tm = cand
            break
        cand -= 32
    if np_ <= tile_k:
        tk = np_
    else:
        tk = LANE
        cand = (tile_k // LANE) * LANE
        while cand >= LANE:
            if np_ % cand == 0:
                tk = cand
                break
            cand -= LANE
    return tm, tk


# --------------------------------------------------------------------------- #
# Pass 1 (tiny, no adjacency): y1 = dinv * (X @ W1)   (column-scaled operand)
# --------------------------------------------------------------------------- #
def proj_kernel(x_ref, w1_ref, dinv_ref, y1_ref):
    xw = jnp.dot(x_ref[...], w1_ref[...], preferred_element_type=jnp.float32)
    y1_ref[...] = (dinv_ref[...] * xw).astype(y1_ref.dtype)


# --------------------------------------------------------------------------- #
# Pass 2: layer-1 propagation (K-tiled A_hat @ y1) + ReLU + layer-2 projection
#   h  = relu(dinv * (A_hat @ y1) + b1)
#   y2 = dinv * (h @ W2)
# --------------------------------------------------------------------------- #
def layer1_kernel(adj_ref, y1_ref, dinv_ref, b1_ref, w2_ref, y2_ref, acc_ref):
    k = pl.program_id(1)

    @pl.when(k == 0)
    def _init():
        acc_ref[...] = jnp.zeros_like(acc_ref)

    acc_ref[...] += jnp.dot(adj_ref[...].astype(jnp.bfloat16), y1_ref[...],
                            preferred_element_type=jnp.float32)

    @pl.when(k == pl.num_programs(1) - 1)
    def _finalize():
        dinv = dinv_ref[...]
        h = jnp.maximum(dinv * acc_ref[...] + b1_ref[...], 0.0)   # ReLU, f32
        # dropout(training=False) -> identity
        y2 = dinv * jnp.dot(h.astype(jnp.bfloat16), w2_ref[...],
                            preferred_element_type=jnp.float32)
        y2_ref[...] = y2.astype(y2_ref.dtype)


# --------------------------------------------------------------------------- #
# Pass 3: layer-2 propagation (K-tiled A_hat @ y2) + bias + log_softmax.
#   b2 already carries -1e30 in the padded class lanes (mask baked in).
# --------------------------------------------------------------------------- #
def layer2_kernel(adj_ref, y2_ref, dinv_ref, b2_ref, out_ref, acc_ref):
    k = pl.program_id(1)

    @pl.when(k == 0)
    def _init():
        acc_ref[...] = jnp.zeros_like(acc_ref)

    acc_ref[...] += jnp.dot(adj_ref[...].astype(jnp.bfloat16), y2_ref[...],
                            preferred_element_type=jnp.float32)

    @pl.when(k == pl.num_programs(1) - 1)
    def _finalize():
        o = dinv_ref[...] * acc_ref[...] + b2_ref[...]
        m = jnp.max(o, axis=1, keepdims=True)
        e = jnp.exp(o - m)                      # padded lanes underflow to 0
        lse = jnp.log(jnp.sum(e, axis=1, keepdims=True))
        out_ref[...] = (o - m - lse).astype(out_ref.dtype)


# --------------------------------------------------------------------------- #
# Graph preprocessing (cache this across forward calls for a fixed graph).
#   A_hat = A + I stored as int8 (0/1 edges exact), dinv = rsqrt(rowsum+1).
#   Assumes adj has a zero diagonal and binary (unweighted) edges.
# --------------------------------------------------------------------------- #
def preprocess_adj(adj):
    adj = jnp.asarray(adj, jnp.float32)
    n = adj.shape[0]
    np_ = _pad_dim(n)
    deg = jnp.sum(adj, axis=1, keepdims=True) + 1.0      # rowsum(A) + self loop
    dinv = jax.lax.rsqrt(deg)
    a_hat = adj + jnp.eye(n, dtype=jnp.float32)
    a_i8 = jnp.pad(a_hat, ((0, np_ - n), (0, np_ - n))).astype(jnp.int8)
    dinv_p = jnp.pad(dinv, ((0, np_ - n), (0, 0)))        # padded rows -> 0 (finite)
    return a_i8, dinv_p


# --------------------------------------------------------------------------- #
# Forward pass given a preprocessed (cached) graph.
# --------------------------------------------------------------------------- #
def gcn_forward_preprocessed(x, graph, w1, b1, w2, b2, *,
                             tile_m=256, tile_k=2048, vmem_limit_bytes=None):
    adj_i8, dinv = graph
    x = jnp.asarray(x, jnp.float32)
    w1 = jnp.asarray(w1, jnp.float32)
    w2 = jnp.asarray(w2, jnp.float32)
    b1 = jnp.asarray(b1, jnp.float32).reshape(1, -1)
    b2 = jnp.asarray(b2, jnp.float32).reshape(1, -1)

    n, f = x.shape
    np_ = adj_i8.shape[0]
    hidden = w1.shape[1]
    nclass = w2.shape[1]
    kh = _round_up(hidden, LANE)
    kc = _round_up(nclass, LANE)

    tm, tk = _tiles(np_, tile_m, tile_k)
    grid_m = np_ // tm
    grid_k = np_ // tk

    def pad2(a, r, c):
        return jnp.pad(a, ((0, r - a.shape[0]), (0, c - a.shape[1])))

    x_b = pad2(x, np_, f).astype(jnp.bfloat16)
    w1_b = pad2(w1, f, kh).astype(jnp.bfloat16)
    w2_b = pad2(w2, kh, kc).astype(jnp.bfloat16)
    b1_p = pad2(b1, 1, kh)                                              # f32
    # class mask baked into the bias: padded lanes get a huge negative logit
    b2_p = jnp.full((1, kc), NEG_BIG, jnp.float32).at[:, :nclass].set(b2[0])

    if vmem_limit_bytes is None:
        foot = (2 * tm * tk                     # adj tile, int8, double buffered
                + 2 * tk * max(kh, kc) * 2      # y block, bf16, double buffered
                + 2 * tm * kc * 4               # out block, f32, double buffered
                + tm * max(kh, kc) * 4          # accumulator scratch
                + kh * kc * 2 + (kh + kc) * 4 + tm * 8)
        try:
            cap = pltpu.get_tpu_info().vmem_capacity_bytes
        except Exception:
            cap = 64 * 1024 * 1024              # v7x per-core floor
        vmem_limit_bytes = int(min(max(32 * 1024 * 1024, 3 * foot),
                                   int(0.9 * cap)))

    cp1 = pltpu.CompilerParams(dimension_semantics=("parallel",),
                               vmem_limit_bytes=vmem_limit_bytes)
    cp2 = pltpu.CompilerParams(dimension_semantics=("parallel", "arbitrary"),
                               vmem_limit_bytes=vmem_limit_bytes)

    # ---- pass 1: y1 = dinv * (X @ W1)  (no adjacency read) -------------------
    y1 = pl.pallas_call(
        proj_kernel,
        grid=(grid_m,),
        in_specs=[pl.BlockSpec((tm, f), lambda i: (i, 0)),
                  pl.BlockSpec((f, kh), lambda i: (0, 0)),
                  pl.BlockSpec((tm, 1), lambda i: (i, 0))],
        out_specs=pl.BlockSpec((tm, kh), lambda i: (i, 0)),
        out_shape=jax.ShapeDtypeStruct((np_, kh), jnp.bfloat16),
        compiler_params=cp1,
    )(x_b, w1_b, dinv)

    adj_spec = pl.BlockSpec((tm, tk), lambda i, k: (i, k))
    dinv_spec = pl.BlockSpec((tm, 1), lambda i, k: (i, 0))

    # ---- pass 2: h = relu(S @ (X W1) + b1); y2 = dinv * (h @ W2) -------------
    y2 = pl.pallas_call(
        layer1_kernel,
        grid=(grid_m, grid_k),
        in_specs=[adj_spec,
                  pl.BlockSpec((tk, kh), lambda i, k: (k, 0)),
                  dinv_spec,
                  pl.BlockSpec((1, kh), lambda i, k: (0, 0)),
                  pl.BlockSpec((kh, kc), lambda i, k: (0, 0))],
        out_specs=pl.BlockSpec((tm, kc), lambda i, k: (i, 0)),
        out_shape=jax.ShapeDtypeStruct((np_, kc), jnp.bfloat16),
        scratch_shapes=[pltpu.VMEM((tm, kh), jnp.float32)],
        compiler_params=cp2,
    )(adj_i8, y1, dinv, b1_p, w2_b)

    # ---- pass 3: out = log_softmax(S @ (h W2) + b2) --------------------------
    out_p = pl.pallas_call(
        layer2_kernel,
        grid=(grid_m, grid_k),
        in_specs=[adj_spec,
                  pl.BlockSpec((tk, kc), lambda i, k: (k, 0)),
                  dinv_spec,
                  pl.BlockSpec((1, kc), lambda i, k: (0, 0))],
        out_specs=pl.BlockSpec((tm, kc), lambda i, k: (i, 0)),
        out_shape=jax.ShapeDtypeStruct((np_, kc), jnp.float32),
        scratch_shapes=[pltpu.VMEM((tm, kc), jnp.float32)],
        compiler_params=cp2,
    )(adj_i8, y2, dinv, b2_p)

    return out_p[:n, :nclass]


def gcn_forward(x, adj, w1, b1, w2, b2, **kw):
    """Convenience wrapper: preprocesses the graph on every call."""
    return gcn_forward_preprocessed(x, preprocess_adj(adj), w1, b1, w2, b2, **kw)


def glorot(key, shape):
    fan_in, fan_out = shape
    limit = (6.0 / (fan_in + fan_out)) ** 0.5
    return jax.random.uniform(key, shape, jnp.float32, -limit, limit)


if __name__ == "__main__":
    key = jax.random.PRNGKey(0)
    n, nfeat, nclass = 300, 24, 7

    k_x, k_a, k_w1, k_w2, k_b1, k_b2 = jax.random.split(key, 6)
    x = jax.random.normal(k_x, (n, nfeat), jnp.float32)

    # random symmetric 0/1 adjacency, no self-loops (preprocess adds them)
    a = (jax.random.uniform(k_a, (n, n)) < 0.05).astype(jnp.float32)
    adj = jnp.clip(a + a.T, 0.0, 1.0) * (1.0 - jnp.eye(n, dtype=jnp.float32))

    w1 = glorot(k_w1, (nfeat, HIDDEN))
    b1 = 0.05 * jax.random.normal(k_b1, (HIDDEN,), jnp.float32)
    w2 = glorot(k_w2, (HIDDEN, nclass))
    b2 = 0.05 * jax.random.normal(k_b2, (nclass,), jnp.float32)

    # preprocess once (cacheable across forward calls for a fixed graph)
    graph = preprocess_adj(adj)
    # small tiles so the demo exercises several row tiles AND k-accumulation steps
    out = gcn_forward_preprocessed(x, graph, w1, b1, w2, b2, tile_m=64, tile_k=128)
    jax.block_until_ready(out)
    assert out.shape == (n, nclass)

    # pure-JAX f32 reference (dense GCNConv semantics)
    a_hat = adj + jnp.eye(n, dtype=jnp.float32)
    dinv_ref = jax.lax.rsqrt(jnp.sum(a_hat, axis=1, keepdims=True))
    S = dinv_ref * a_hat * dinv_ref.T
    h = jnp.maximum(S @ (x @ w1) + b1[None, :], 0.0)
    ref = jax.nn.log_softmax(S @ (h @ w2) + b2[None, :], axis=1)

    # bf16 matmuls -> loose tolerance; rows of exp(log_softmax) must sum to 1.
    assert jnp.allclose(jnp.sum(jnp.exp(out), axis=1), 1.0, atol=1e-4)
    err = float(jnp.max(jnp.abs(out - ref)))
    assert err < 0.1, err
    print("KERNEL_OK")
</pallas_src>

<mosaic_0001>
module attributes {stable_mosaic.version = 11 : i64} {
  func.func @proj_kernel(%arg0: i32, %arg1: memref<64x24xbf16, #tpu.memory_space<vmem>>, %arg2: memref<24x128xbf16, #tpu.memory_space<vmem>>, %arg3: memref<64x1xf32, #tpu.memory_space<vmem>>, %arg4: memref<64x128xbf16, #tpu.memory_space<vmem>>) attributes {dimension_semantics = [#tpu.dimension_semantics<parallel>], iteration_bounds = array<i64: 6>, scalar_prefetch = 0 : i64, scratch_operands = 0 : i64, tpu.core_type = #tpu.core_type<tc>, window_params = [{transform_indices = @transform_0, window_bounds = array<i64: 64, 24>}, {pipeline_mode = #tpu.pipeline_mode<synchronous>, transform_indices = @transform_1, window_bounds = array<i64: 24, 128>}, {transform_indices = @transform_2, window_bounds = array<i64: 64, 1>}, {transform_indices = @transform_3, window_bounds = array<i64: 64, 128>}]} {
    %c0 = arith.constant 0 : index
    %c0_0 = arith.constant 0 : index
    %0 = vector.load %arg1[%c0, %c0_0] : memref<64x24xbf16, #tpu.memory_space<vmem>>, vector<64x24xbf16>
    %c0_1 = arith.constant 0 : index
    %c0_2 = arith.constant 0 : index
    %1 = vector.load %arg2[%c0_1, %c0_2] : memref<24x128xbf16, #tpu.memory_space<vmem>>, vector<24x128xbf16>
    %cst = arith.constant dense<0.000000e+00> : vector<64x128xf32>
    %2 = tpu.matmul %0, %1, %cst {dimension_numbers = #tpu.dot_dimension_numbers<[1], [0], [0], [1], [0, 0, 1, 1], [], []>} : vector<64x24xbf16>, vector<24x128xbf16>, vector<64x128xf32> -> vector<64x128xf32>
    %c0_3 = arith.constant 0 : index
    %c0_4 = arith.constant 0 : index
    %3 = vector.load %arg3[%c0_3, %c0_4] : memref<64x1xf32, #tpu.memory_space<vmem>>, vector<64x1xf32>
    %4 = vector.broadcast %3 : vector<64x1xf32> to vector<64x128xf32>
    %5 = arith.mulf %4, %2 : vector<64x128xf32>
    %6 = arith.truncf %5 : vector<64x128xf32> to vector<64x128xbf16>
    %c0_5 = arith.constant 0 : index
    %c0_6 = arith.constant 0 : index
    %7 = vector.load %arg4[%c0_5, %c0_6] : memref<64x128xbf16, #tpu.memory_space<vmem>>, vector<64x128xbf16>
    tpu.vector_store %arg4[%c0_5, %c0_6], %6 {strides = array<i32>} : memref<64x128xbf16, #tpu.memory_space<vmem>>, vector<64x128xbf16>,
    return
  }
  func.func @transform_0(%arg0: i32) -> (i32, i32) {
    %c0_i32 = arith.constant 0 : i32
    %c0_i32_0 = arith.constant 0 : i32
    return %arg0, %c0_i32 : i32, i32
  }
  func.func @transform_1(%arg0: i32) -> (i32, i32) {
    %c0_i32 = arith.constant 0 : i32
    %c0_i32_0 = arith.constant 0 : i32
    %c0_i32_1 = arith.constant 0 : i32
    return %c0_i32, %c0_i32_0 : i32, i32
  }
  func.func @transform_2(%arg0: i32) -> (i32, i32) {
    %c0_i32 = arith.constant 0 : i32
    %c0_i32_0 = arith.constant 0 : i32
    return %arg0, %c0_i32 : i32, i32
  }
  func.func @transform_3(%arg0: i32) -> (i32, i32) {
    %c0_i32 = arith.constant 0 : i32
    %c0_i32_0 = arith.constant 0 : i32
    return %arg0, %c0_i32 : i32, i32
  }
}

</mosaic_0001>

<llo_original>
// kernel: tpu_custom_call.1
$region0: #{tpu_custom_call.1}
  #allocation0 [shape = 'u32[]', space=smem, size = 0x4, offset = 0x4, fixed_abs, tag = 'smem constant byte address 0x4 - core index']
  #allocation1 [shape = 'u32[144,128]{1,0:T(1,128)}', space=vmem, size = 0x12000, scoped, tag = 'internal scratch']
  %s0 = inlined_call_operand.vmem [shape: bf16[384,24], index: 0, kind: input, shape index: {}]
  %s1 = inlined_call_operand.vmem [shape: bf16[24,128], index: 1, kind: input, shape index: {}]
  %s2 = inlined_call_operand.vmem [shape: f32[384,1], index: 2, kind: input, shape index: {}]
  %s3 = inlined_call_operand.hbm [shape: bf16[384,128], index: 3, kind: output, shape index: {}]
  %s4 = sld [smem:[#allocation0]]
  $region45: #{tpu_custom_call.1} parent=0
    _
  %s6 = ssub.s32 1, %s4
  %s7 = scalar_select 0, %s6, %s4
  $region1: #{tpu_custom_call.1} parent=0
    #allocation2 [shape = 'u8[32768]{0}', space=vmem, size = 0x8000, scoped, tag = 'output window, operand 0']
    #allocation3 [shape = 's32[2]{0}', space=sflag, size = 0x8, scoped, tag = 'scoped memory for tpu_custom_call.1']
    %8 = vsyncpa [#allocation3], 0
    %s9 = scalar_lea.sflag [#allocation3], 1
    %10 = vsyncpa %s9, 0
    loop: start=0, step=1, limit=8
    $region2: #{tpu_custom_call.1} parent=1 // loop_pre_header
      _
    $region3: #{tpu_custom_call.1} parent=1 // loop_header
      %s12 = sphi 0, %s16
      %p13 = scmp.ge.s32.totalorder %s12, 8
      %s22 = sphi 0, %s24
      %s25 = sphi 0, %s22
      %s26 = sphi 0, %s25
      %s42 = sphi 0, %s26
      %s46 = sphi 0, %s46
      %s48 = sphi 0, %s46
      %s49 = sphi 0, %s48
      %s63 = sphi 0, %s49
      %s69 = sphi 0, %s71
      %s72 = sphi 0, %s69
      %s73 = sphi 0, %s72
      %s89 = sphi 0, %s73
      %s95 = sphi 0, %s97
      %s98 = sphi 0, %s95
      %s99 = sphi 0, %s98
      %s115 = sphi 0, %s99
    $region4: #{tpu_custom_call.1} parent=1 // loop_header_branch
      %15 = sbr.rel (%p13) target = $region8
    $region5: #{tpu_custom_call.1} parent=1 // loop_body
      %s17 = ssub.s32 %s12, 1
      %s18 = ssub.s32 %s12, 2
      %s19 = sadd.s32 %s12, 1
      %s20 = ssub.s32 %s12, %s19
      %p21 = scmp.eq.s32.totalorder %s20, 0
      %s23 = sadd.s32 %s22, 1
      %s24 = scalar_select %p21, %s22, %s23
      %p27 = pneg %p21
      %p28 = scmp.eq.s32.totalorder %s12, 5
      %p29 = por %p27, %p28
      %p30 = scmp.ne.s32.totalorder %s22, %s25
      %p31 = scmp.eq.s32.totalorder %s12, 0
      %p32 = por %p30, %p31
      %p33 = scmp.ne.s32.totalorder %s22, %s25
      %p34 = scmp.eq.s32.totalorder %s17, 5
      %p35 = por %p33, %p34
      %p36 = scmp.ne.s32.totalorder %s25, %s26
      %p37 = scmp.eq.s32.totalorder %s17, 0
      %p38 = por %p36, %p37
      %p39 = scmp.ne.s32.totalorder %s25, %s26
      %p40 = scmp.eq.s32.totalorder %s18, 5
      %p41 = por %p39, %p40
      %p43 = scmp.ne.s32.totalorder %s26, %s42
      %p44 = scmp.eq.s32.totalorder %s18, 0
      %p45 = por %p43, %p44
      %s47 = sadd.s32 %s46, 1
      %p50 = scmp.eq.s32.totalorder %s12, 5
      %p51 = scmp.ne.s32.totalorder %s46, %s48
      %p52 = scmp.eq.s32.totalorder %s12, 0
      %p53 = por %p51, %p52
      %p54 = scmp.ne.s32.totalorder %s46, %s48
      %p55 = scmp.eq.s32.totalorder %s17, 5
      %p56 = por %p54, %p55
      %p57 = scmp.ne.s32.totalorder %s48, %s49
      %p58 = scmp.eq.s32.totalorder %s17, 0
      %p59 = por %p57, %p58
      %p60 = scmp.ne.s32.totalorder %s48, %s49
      %p61 = scmp.eq.s32.totalorder %s18, 5
      %p62 = por %p60, %p61
      %p64 = scmp.ne.s32.totalorder %s49, %s63
      %p65 = scmp.eq.s32.totalorder %s18, 0
      %p66 = por %p64, %p65
      %s67 = ssub.s32 %s12, %s19
      %p68 = scmp.eq.s32.totalorder %s67, 0
      %s70 = sadd.s32 %s69, 1
      %s71 = scalar_select %p68, %s69, %s70
      %p74 = pneg %p68
      %p75 = scmp.eq.s32.totalorder %s12, 5
      %p76 = por %p74, %p75
      %p77 = scmp.ne.s32.totalorder %s69, %s72
      %p78 = scmp.eq.s32.totalorder %s12, 0
      %p79 = por %p77, %p78
      %p80 = scmp.ne.s32.totalorder %s69, %s72
      %p81 = scmp.eq.s32.totalorder %s17, 5
      %p82 = por %p80, %p81
      %p83 = scmp.ne.s32.totalorder %s72, %s73
      %p84 = scmp.eq.s32.totalorder %s17, 0
      %p85 = por %p83, %p84
      %p86 = scmp.ne.s32.totalorder %s72, %s73
      %p87 = scmp.eq.s32.totalorder %s18, 5
      %p88 = por %p86, %p87
      %p90 = scmp.ne.s32.totalorder %s73, %s89
      %p91 = scmp.eq.s32.totalorder %s18, 0
      %p92 = por %p90, %p91
      %s93 = ssub.s32 %s12, %s19
      %p94 = scmp.eq.s32.totalorder %s93, 0
      %s96 = sadd.s32 %s95, 1
      %s97 = scalar_select %p94, %s95, %s96
      %p100 = pneg %p94
      %p101 = scmp.eq.s32.totalorder %s12, 5
      %p102 = por %p100, %p101
      %p103 = scmp.ne.s32.totalorder %s95, %s98
      %p104 = scmp.eq.s32.totalorder %s12, 0
      %p105 = por %p103, %p104
      %p106 = scmp.ne.s32.totalorder %s95, %s98
      %p107 = scmp.eq.s32.totalorder %s17, 5
      %p108 = por %p106, %p107
      %p109 = scmp.ne.s32.totalorder %s98, %s99
      %p110 = scmp.eq.s32.totalorder %s17, 0
      %p111 = por %p109, %p110
      %p112 = scmp.ne.s32.totalorder %s98, %s99
      %p113 = scmp.eq.s32.totalorder %s18, 5
      %p114 = por %p112, %p113
      %p116 = scmp.ne.s32.totalorder %s99, %s115
      %p117 = scmp.eq.s32.totalorder %s18, 0
      %p118 = por %p116, %p117
      %p119 = scmp.le.s32.totalorder 1, %s12
      %p120 = scmp.lt.s32.totalorder %s12, 7
      %p121 = pnand %p119, %p120
      %p122 = pneg %p121
      // Predicated region
      $region9: #{tpu_custom_call.1} parent=5 // pred_check
        _
      $region10: #{tpu_custom_call.1} parent=5 // pred_check_branch
        %124 = sbr.rel (%p121) target = $region12
      $region11: #{tpu_custom_call.1} parent=5 // pred_region
        %s125 = ssub.s32 %s12, 1
        // Predicated region
        $region13: #{tpu_custom_call.1} parent=11 // pred_check
          %p126 = pneg %p59
        $region14: #{tpu_custom_call.1} parent=11 // pred_check_branch
          %128 = sbr.rel (%p126) target = $region16
        $region15: #{tpu_custom_call.1} parent=11 // pred_region
          _
        $region16: #{tpu_custom_call.1} parent=11 // pred_fallthru
          _
      $region12: #{tpu_custom_call.1} parent=5 // pred_fallthru
        _
      %p129 = scmp.lt.s32.totalorder %s12, 6
      // Predicated region
      $region17: #{tpu_custom_call.1} parent=5 // pred_check
        %p130 = pneg %p129
      $region18: #{tpu_custom_call.1} parent=5 // pred_check_branch
        %132 = sbr.rel (%p130) target = $region20
      $region19: #{tpu_custom_call.1} parent=5 // pred_region
        // Predicated region
        $region21: #{tpu_custom_call.1} parent=19 // pred_check
          %p133 = pneg %p32
        $region22: #{tpu_custom_call.1} parent=19 // pred_check_branch
          %135 = sbr.rel (%p133) target = $region24
        $region23: #{tpu_custom_call.1} parent=19 // pred_region
          %s136 = smul.u32 8, %s12
          %p137 = scmp.lt.s32.totalorder %s136, 47
          %s138 = scalar_select %p137, %s136, 47
          %s139 = smul.addr %s138, 4
          %s140 = scalar_lea.vmem %s0, %s139
          %s141 = smul.u32 8, %s12
        $region24: #{tpu_custom_call.1} parent=19 // pred_fallthru
          _
        // Predicated region
        $region25: #{tpu_custom_call.1} parent=19 // pred_check
          %p142 = pneg %p79
        $region26: #{tpu_custom_call.1} parent=19 // pred_check_branch
          %144 = sbr.rel (%p142) target = $region28
        $region27: #{tpu_custom_call.1} parent=19 // pred_region
          %s145 = smul.u32 8, %s12
          %p146 = scmp.lt.s32.totalorder %s145, 47
          %s147 = scalar_select %p146, %s145, 47
          %s148 = smul.addr %s147, 8
          %s149 = scalar_lea.vmem %s2, %s148
          %s150 = smul.u32 8, %s12
        $region28: #{tpu_custom_call.1} parent=19 // pred_fallthru
          _
      $region20: #{tpu_custom_call.1} parent=5 // pred_fallthru
        _
      %p151 = scmp.le.s32.totalorder 1, %s12
      %p152 = scmp.lt.s32.totalorder %s12, 7
      %p153 = pnand %p151, %p152
      %p154 = pneg %p153
      // Predicated region
      $region29: #{tpu_custom_call.1} parent=5 // pred_check
        _
      $region30: #{tpu_custom_call.1} parent=5 // pred_check_branch
        %156 = sbr.rel (%p153) target = $region32
      $region31: #{tpu_custom_call.1} parent=5 // pred_region
        %s157 = ssub.s32 %s12, 1
        %s158 = smul.u32 8, %s17
        %p159 = scmp.lt.s32.totalorder %s158, 47
        %s160 = scalar_select %p159, %s158, 47
        %s161 = smul.addr %s160, 4
        %s162 = scalar_lea.vmem %s0, %s161
        %p163 = pneg %p38
        %p164 = pneg %p35
        %p165 = pneg %p59
        %p166 = pneg %p56
        %s167 = smul.u32 8, %s17
        %p168 = scmp.lt.s32.totalorder %s167, 47
        %s169 = scalar_select %p168, %s167, 47
        %s170 = smul.addr %s169, 8
        %s171 = scalar_lea.vmem %s2, %s170
        %p172 = pneg %p85
        %p173 = pneg %p82
        %p174 = pneg %p111
        %p175 = pneg %p108
        %s176 = sand.u32 %s98, 1
        %s177 = scalar_lea.sflag [#allocation3], %s176
        %s178 = sand.u32 %s98, 1
        %s179 = smul.addr %s178, 32
        %s180 = scalar_lea.vmem [#allocation2], %s179
        %s181 = smul.u32 8, %s17
        %p182 = scmp.lt.s32.totalorder %s181, 47
        %s183 = scalar_select %p182, %s181, 47
        %s184 = smul.addr %s183, 4
        %s185 = scalar_lea.vmem %s0, %s184
        %s186 = smul.u32 8, %s17
        %s187 = smul.u32 8, %s17
        %p188 = scmp.lt.s32.totalorder %s187, 47
        %s189 = scalar_select %p188, %s187, 47
        %s190 = smul.addr %s189, 8
        %s191 = scalar_lea.vmem %s2, %s190
        %s192 = smul.u32 8, %s17
        %s193 = smul.u32 8, %s17
        %v195 = vld [vmem:[%s185] sm:$0xf]
        %v196 = vld [vmem:[%s185 + $0x4] sm:$0xf]
        %v197 = vld [vmem:[%s185 + $0x8] sm:$0xf]
        %v198 = vld [vmem:[%s185 + $0xc] sm:$0xf]
        %v199 = vld [vmem:[%s185 + $0x10] sm:$0xf]
        %v200 = vld [vmem:[%s185 + $0x14] sm:$0xf]
        %v201 = vld [vmem:[%s185 + $0x18] sm:$0xf]
        %v202 = vld [vmem:[%s185 + $0x1c] sm:$0xf]
        %v203 = vld [vmem:[%s1] sm:$0xf]
        %v204 = vld [vmem:[%s1 + $0x4] sm:$0xf]
        %v205 = vld [vmem:[%s1 + $0x8] sm:$0xf]
        %v214 = vunpack.c.l.b16 %v195
        %v215 = vunpack.c.l.b16 %v196
        %v216 = vunpack.c.l.b16 %v197
        %v217 = vunpack.c.l.b16 %v198
        %v218 = vunpack.c.l.b16 %v199
        %v219 = vunpack.c.l.b16 %v200
        %v220 = vunpack.c.l.b16 %v201
        %v221 = vunpack.c.l.b16 %v202
        %v222 = vpack.c.b16 %v215, %v214
        %v223 = vpack.c.b16 %v217, %v216
        %v224 = vpack.c.b16 %v219, %v218
        %v225 = vpack.c.b16 %v221, %v220
        %v229 = vunpack.c.l.b16 %v203
        %v230 = vunpack.c.l.b16 %v204
        %v231 = vunpack.c.l.b16 %v205
        %v232 = vpack.c.b16 %v230, %v229
        %v233 = vpack.c.b16 %v231, %v231
        %vm235 = vcmask 195584
        %v237 = vsel %vm235, %v222, 0
        %v240 = vsel %vm235, %v223, 0
        %v243 = vsel %vm235, %v224, 0
        %v246 = vsel %vm235, %v225, 0
        %vm248 = vcmask 1043456
        %v250 = vsel %vm248, %v233, 0
        %252 = vmatprep.subr.bf16.mxu0 0
        %253 = vmatpush1.bf16.msra.mxu0 0
        %254 = vmatprep.subr.bf16.mxu0 0
        %255 = vmatpush1.bf16.msra.mxu0 0
        %256 = vmatprep.subr.bf16.mxu0 0
        %257 = vmatpush1.bf16.msra.mxu0 0
        %258 = vmatprep.subr.bf16.mxu0 0
        %259 = vmatpush1.bf16.msra.mxu0 0
        %260 = vmatprep.subr.bf16.mxu0 0
        %261 = vmatpush1.bf16.msra.mxu0 0
        %262 = vmatprep.subr.bf16.mxu0 0
        %263 = vmatpush1.bf16.msra.mxu0 0
        %264 = vmatprep.subr.bf16.mxu0 0
        %265 = vmatpush1.bf16.msra.mxu0 %v250
        %266 = vmatprep.subr.bf16.mxu0 0
        %267 = vmatpush1.bf16.msra.mxu0 %v232
        %268 = vmatprep.subr.bf16.mxu0 0
        %269 = vmatpush2.bf16.msra.mxu0 0
        %270 = vmatprep.subr.bf16.mxu0 0
        %271 = vmatpush2.bf16.msra.mxu0 0
        %272 = vmatprep.subr.bf16.mxu0 0
        %273 = vmatpush2.bf16.msra.mxu0 0
        %274 = vmatprep.subr.bf16.mxu0 0
        %275 = vmatpush2.bf16.msra.mxu0 0
        %276 = vmatprep.subr.bf16.mxu0 0
        %277 = vmatpush2.bf16.msra.mxu0 0
        %278 = vmatprep.subr.bf16.mxu0 0
        %279 = vmatpush2.bf16.msra.mxu0 0
        %280 = vmatprep.subr.bf16.mxu0 0
        %281 = vmatpush2.bf16.msra.mxu0 0
        %282 = vmatprep.subr.bf16.mxu0 0
        %283 = vmatpush2.bf16.msra.mxu0 0
        %284 = vmatprep.mubr.bf16.mxu0 0
        %285 = vmatmul.mubr.bf16.gmra.mxu0 %v237
        %v286 = vpop.f32.mrf.mxu0
        %v287 = vadd.f32 0.0, %v286
        %v288 = vpop.f32.mrf.mxu0
        %v289 = vpop.f32.mrf.mxu0
        %v290 = vadd.f32 0.0, %v289
        %v291 = vpop.f32.mrf.mxu0
        %292 = vmatprep.mubr.bf16.mxu0 0
        %293 = vmatmul.mubr.bf16.gmra.mxu0 %v240
        %v294 = vpop.f32.mrf.mxu0
        %v295 = vadd.f32 0.0, %v294
        %v296 = vpop.f32.mrf.mxu0
        %v297 = vpop.f32.mrf.mxu0
        %v298 = vadd.f32 0.0, %v297
        %v299 = vpop.f32.mrf.mxu0
        %300 = vmatprep.mubr.bf16.mxu0 0
        %301 = vmatmul.mubr.bf16.gmra.mxu0 %v243
        %v302 = vpop.f32.mrf.mxu0
        %v303 = vadd.f32 0.0, %v302
        %v304 = vpop.f32.mrf.mxu0
        %v305 = vpop.f32.mrf.mxu0
        %v306 = vadd.f32 0.0, %v305
        %v307 = vpop.f32.mrf.mxu0
        %308 = vmatprep.mubr.bf16.mxu0 0
        %309 = vmatmul.mubr.bf16.gmra.mxu0 %v246
        %v310 = vpop.f32.mrf.mxu0
        %v311 = vadd.f32 0.0, %v310
        %v312 = vpop.f32.mrf.mxu0
        %v313 = vpop.f32.mrf.mxu0
        %v314 = vadd.f32 0.0, %v313
        %v315 = vpop.f32.mrf.mxu0
        %316 = vdwg.mxu0
        %v317 = vld [vmem:[%s191] sm:$0xff]
        %v318 = vld [vmem:[%s191 + $0x8] sm:$0xff]
        %v319 = vld [vmem:[%s191 + $0x10] sm:$0xff]
        %v320 = vld [vmem:[%s191 + $0x18] sm:$0xff]
        %v321 = vld [vmem:[%s191 + $0x20] sm:$0xff]
        %v322 = vld [vmem:[%s191 + $0x28] sm:$0xff]
        %v323 = vld [vmem:[%s191 + $0x30] sm:$0xff]
        %v324 = vld [vmem:[%s191 + $0x38] sm:$0xff]
        %326 = vset.pattern.permute.xlu0 0
        %327 = vperm.xlu0 %326, %v317
        %v328 = vpop.permute.xlu0 %327
        %331 = vset.pattern.permute.xlu0 0
        %332 = vperm.xlu0 %331, %v318
        %v333 = vpop.permute.xlu0 %332
        %336 = vset.pattern.permute.xlu0 0
        %337 = vperm.xlu0 %336, %v319
        %v338 = vpop.permute.xlu0 %337
        %341 = vset.pattern.permute.xlu0 0
        %342 = vperm.xlu0 %341, %v320
        %v343 = vpop.permute.xlu0 %342
        %346 = vset.pattern.permute.xlu0 0
        %347 = vperm.xlu0 %346, %v321
        %v348 = vpop.permute.xlu0 %347
        %351 = vset.pattern.permute.xlu0 0
        %352 = vperm.xlu0 %351, %v322
        %v353 = vpop.permute.xlu0 %352
        %356 = vset.pattern.permute.xlu0 0
        %357 = vperm.xlu0 %356, %v323
        %v358 = vpop.permute.xlu0 %357
        %361 = vset.pattern.permute.xlu0 0
        %362 = vperm.xlu0 %361, %v324
        %v363 = vpop.permute.xlu0 %362
        %v365 = vmul.f32 %v328, %v287
        %v366 = vmul.f32 %v333, %v290
        %v367 = vmul.f32 %v338, %v295
        %v368 = vmul.f32 %v343, %v298
        %v369 = vmul.f32 %v348, %v303
        %v370 = vmul.f32 %v353, %v306
        %v371 = vmul.f32 %v358, %v311
        %v372 = vmul.f32 %v363, %v314
        %v373 = vpack.c.bf16 %v366, %v365
        %v374 = vpack.c.bf16 %v368, %v367
        %v375 = vpack.c.bf16 %v370, %v369
        %v376 = vpack.c.bf16 %v372, %v371
        %v381 = vunpack.c.l.b16 %v373
        %v382 = vunpack.c.h.b16 %v373
        %v383 = vunpack.c.l.b16 %v374
        %v384 = vunpack.c.h.b16 %v374
        %v385 = vunpack.c.l.b16 %v375
        %v386 = vunpack.c.h.b16 %v375
        %v387 = vunpack.c.l.b16 %v376
        %v388 = vunpack.c.h.b16 %v376
        %v389 = vpack.c.b16 %v381, %v381
        %v390 = vpack.c.b16 %v382, %v382
        %v391 = vpack.c.b16 %v383, %v383
        %v392 = vpack.c.b16 %v384, %v384
        %v393 = vpack.c.b16 %v385, %v385
        %v394 = vpack.c.b16 %v386, %v386
        %v395 = vpack.c.b16 %v387, %v387
        %v396 = vpack.c.b16 %v388, %v388
        %405 = vst [vmem:[%s180] sm:$0xf] %v389
        %406 = vst [vmem:[%s180 + $0x4] sm:$0xf] %v390
        %407 = vst [vmem:[%s180 + $0x8] sm:$0xf] %v391
        %408 = vst [vmem:[%s180 + $0xc] sm:$0xf] %v392
        %409 = vst [vmem:[%s180 + $0x10] sm:$0xf] %v393
        %410 = vst [vmem:[%s180 + $0x14] sm:$0xf] %v394
        %411 = vst [vmem:[%s180 + $0x18] sm:$0xf] %v395
        %412 = vst [vmem:[%s180 + $0x1c] sm:$0xf] %v396
        %s413 = sand.u32 %s98, 1
        %s414 = scalar_lea.sflag [#allocation3], %s413
        %s415 = sand.u32 %s98, 1
        %s416 = smul.addr %s415, 32
        %s417 = scalar_lea.vmem [#allocation2], %s416
        // Predicated region
        $region33: #{tpu_custom_call.1} parent=31 // pred_check
          %p418 = pneg %p108
        $region34: #{tpu_custom_call.1} parent=31 // pred_check_branch
          %420 = sbr.rel (%p418) target = $region36
        $region35: #{tpu_custom_call.1} parent=31 // pred_region
          %s421 = smul.u32 8, %s17
          %s423 = ssub.s32 512, 512
          %424 = vsyncadd %s414, %s423
          %s425 = smul.addr %s421, 64
          %s426 = scalar_lea.hbm %s3, %s425
          %s427 = sshll.u32 %s417, 4
          %s428 = int_to_ptr.vmem [resolvable:$true] %s427
          %433 = dma.vmem_to_hbm [thread:$0]  %s428, 512, %s426, %s414, 64, 64, 4
        $region36: #{tpu_custom_call.1} parent=31 // pred_fallthru
          _
      $region32: #{tpu_custom_call.1} parent=5 // pred_fallthru
        _
      %p434 = scmp.le.s32.totalorder 2, %s12
      // Predicated region
      $region37: #{tpu_custom_call.1} parent=5 // pred_check
        %p435 = pneg %p434
      $region38: #{tpu_custom_call.1} parent=5 // pred_check_branch
        %437 = sbr.rel (%p435) target = $region40
      $region39: #{tpu_custom_call.1} parent=5 // pred_region
        %s438 = ssub.s32 %s12, 2
        // Predicated region
        $region41: #{tpu_custom_call.1} parent=39 // pred_check
          %p439 = pneg %p114
        $region42: #{tpu_custom_call.1} parent=39 // pred_check_branch
          %441 = sbr.rel (%p439) target = $region44
        $region43: #{tpu_custom_call.1} parent=39 // pred_region
          %s442 = sand.u32 %s99, 1
          %s443 = scalar_lea.sflag [#allocation3], %s442
          %s444 = sand.u32 %s99, 1
          %s445 = smul.addr %s444, 32
          %s446 = scalar_lea.vmem [#allocation2], %s445
          %447 = dma.done %s443, 512
        $region44: #{tpu_custom_call.1} parent=39 // pred_fallthru
          _
      $region40: #{tpu_custom_call.1} parent=5 // pred_fallthru
        _
    $region6: #{tpu_custom_call.1} parent=1 // loop_footer
      %s16 = sadd.s32 1, %s12
    $region7: #{tpu_custom_call.1} parent=1 // loop_footer_branch
      %11 = sbr.rel target = $region3
    $region8: #{tpu_custom_call.1} parent=1 // loop_exit
      _
    %448 = vsyncpa [#allocation3], 1
    %s449 = scalar_lea.sflag [#allocation3], 1
    %450 = vsyncpa %s449, 1

</llo_original>
